<compile_context>
chip_gen: v6e
topology: v6e:2x2x1
jax: 0.10.0
libtpu: 0.0.40
codegen_flags: <defaults>
</compile_context>

<pallas_src>
import functools

import jax
import jax.numpy as jnp
from jax.experimental import pallas as pl
from jax.experimental.pallas import tpu as pltpu

LANE = 128  # TPU lane width; all feature dims are padded to this.


def _round_up(x, m):
    return ((x + m - 1) // m) * m


def generator_kernel(z_ref, w_ref, b_ref, o_ref):
    """Fused 4-layer MLP on one (TILE_B, F) activation tile.

    z_ref : (TILE_B, F)  bf16 activation tile (batch tile of the grid)
    w_ref : (4, F, F)    bf16 packed, zero-padded weights (VMEM-resident)
    b_ref : (4, 1, F)    f32  packed, zero-padded biases (VMEM-resident)
    o_ref : (TILE_B, F)  f32  output tile
    """
    x = z_ref[...]  # bf16

    # Layer 1: (TILE_B,F) @ (F,F) on MXU, f32 accumulate; epilogue in f32.
    h = jnp.dot(x, w_ref[0], preferred_element_type=jnp.float32) + b_ref[0]
    h = jnp.maximum(h, 0.0)

    h = jnp.dot(h.astype(jnp.bfloat16), w_ref[1],
                preferred_element_type=jnp.float32) + b_ref[1]
    h = jnp.maximum(h, 0.0)

    h = jnp.dot(h.astype(jnp.bfloat16), w_ref[2],
                preferred_element_type=jnp.float32) + b_ref[2]
    h = jnp.maximum(h, 0.0)

    out = jnp.dot(h.astype(jnp.bfloat16), w_ref[3],
                  preferred_element_type=jnp.float32) + b_ref[3]
    o_ref[...] = out.astype(o_ref.dtype)


def pack_params(params, feat_pad=LANE):
    """Zero-pad every weight/bias to (feat_pad, feat_pad)/(1, feat_pad) and
    pack them into two contiguous buffers (weights bf16, biases f32)."""
    (w1, b1, w2, b2, w3, b3, w4, b4) = params

    def pad_w(w):
        out = jnp.zeros((feat_pad, feat_pad), jnp.float32)
        return out.at[: w.shape[0], : w.shape[1]].set(w)

    def pad_b(b):
        b = jnp.asarray(b, jnp.float32).reshape(1, -1)
        out = jnp.zeros((1, feat_pad), jnp.float32)
        return out.at[:, : b.shape[1]].set(b)

    w_pack = jnp.stack([pad_w(w1), pad_w(w2), pad_w(w3), pad_w(w4)]
                       ).astype(jnp.bfloat16)                 # (4, F, F) bf16
    b_pack = jnp.stack([pad_b(b1), pad_b(b2), pad_b(b3), pad_b(b4)])  # (4,1,F) f32
    return w_pack, b_pack


def generator_forward(z, w_pack, b_pack, data_dim, tile_b=512):
    """Run the fused Generator MLP. z: (B, data_dim) f32. Returns (B, data_dim) f32."""
    B = z.shape[0]
    F = w_pack.shape[-1]

    tile_b = min(tile_b, _round_up(B, 8))       # never tile bigger than needed
    b_pad = _round_up(B, tile_b)

    # Pad batch + features once; activations travel as bf16 (halves z DMA bytes).
    z_p = jnp.zeros((b_pad, F), jnp.bfloat16)
    z_p = z_p.at[:B, : z.shape[1]].set(z.astype(jnp.bfloat16))

    grid = (b_pad // tile_b,)

    out = pl.pallas_call(
        generator_kernel,
        out_shape=jax.ShapeDtypeStruct((b_pad, F), jnp.float32),
        grid_spec=pltpu.PrefetchScalarGridSpec(
            num_scalar_prefetch=0,
            grid=grid,
            in_specs=[
                # Activation tile: streamed / double-buffered along the grid.
                pl.BlockSpec((tile_b, F), lambda i: (i, 0)),
                # Packed weights & biases: constant index_map -> fetched once,
                # VMEM-resident for every grid step.
                pl.BlockSpec((4, F, F), lambda i: (0, 0, 0)),
                pl.BlockSpec((4, 1, F), lambda i: (0, 0, 0)),
            ],
            out_specs=pl.BlockSpec((tile_b, F), lambda i: (i, 0)),
        ),
        compiler_params=pltpu.CompilerParams(
            dimension_semantics=("parallel",),  # shard batch grid across TCs (v7x)
        ),
    )(z_p, w_pack, b_pack)

    return out[:B, :data_dim]


def init_params(key, data_dim, hidden_dim):
    """Deterministic synthetic init (PyTorch-like uniform fan-in scaling)."""
    def linear(key, fan_in, fan_out):
        k_w, k_b = jax.random.split(key)
        bound = 1.0 / jnp.sqrt(fan_in)
        w = jax.random.uniform(k_w, (fan_in, fan_out), jnp.float32, -bound, bound)
        b = jax.random.uniform(k_b, (1, fan_out), jnp.float32, -bound, bound)
        return w, b

    k1, k2, k3, k4 = jax.random.split(key, 4)
    w1, b1 = linear(k1, data_dim, hidden_dim)
    w2, b2 = linear(k2, hidden_dim, hidden_dim)
    w3, b3 = linear(k3, hidden_dim, hidden_dim)
    w4, b4 = linear(k4, hidden_dim, data_dim)
    return (w1, b1, w2, b2, w3, b3, w4, b4)


def generator_ref(z, params, match_kernel_precision=True):
    """Plain-JAX reference. With match_kernel_precision, mirrors the kernel's
    bf16-matmul / f32-accumulate / f32-epilogue numerics."""
    (w1, b1, w2, b2, w3, b3, w4, b4) = params

    if match_kernel_precision:
        def dot(a, w):
            return jnp.dot(a.astype(jnp.bfloat16), w.astype(jnp.bfloat16),
                           preferred_element_type=jnp.float32)
    else:
        def dot(a, w):
            return jnp.dot(a, w, preferred_element_type=jnp.float32)

    h = jnp.maximum(dot(z, w1) + b1, 0.0)
    h = jnp.maximum(dot(h, w2) + b2, 0.0)
    h = jnp.maximum(dot(h, w3) + b3, 0.0)
    return dot(h, w4) + b4


if __name__ == "__main__":
    data_dim = 16
    hidden_dim = 32
    batch = 256          # batched so the grid actually pipelines (grid=2 below)

    key = jax.random.PRNGKey(0)
    k_params, k_z = jax.random.split(key)

    params = init_params(k_params, data_dim, hidden_dim)
    z = jax.random.normal(k_z, (batch, data_dim), jnp.float32)

    # Pack / pad parameters once (done outside the per-call hot path).
    w_pack, b_pack = pack_params(params)

    out = generator_forward(z, w_pack, b_pack, data_dim, tile_b=128)
    out = jax.block_until_ready(out)
    assert out.shape == (batch, data_dim)

    # Bit-faithful check against a reference using the same bf16/f32 numerics.
    ref_bf16 = generator_ref(z, params, match_kernel_precision=True)
    assert jnp.allclose(out, ref_bf16, atol=2e-3, rtol=2e-3), \
        float(jnp.max(jnp.abs(out - ref_bf16)))

    # Loose semantic check against the pure-f32 reference (bf16 matmul error).
    ref_f32 = generator_ref(z, params, match_kernel_precision=False)
    assert jnp.allclose(out, ref_f32, atol=1e-1, rtol=1e-1), \
        float(jnp.max(jnp.abs(out - ref_f32)))

    print("KERNEL_OK")
</pallas_src>

<mosaic_0001>
module attributes {stable_mosaic.version = 11 : i64} {
  func.func @generator_kernel(%arg0: i32, %arg1: memref<128x128xbf16, #tpu.memory_space<vmem>>, %arg2: memref<4x128x128xbf16, #tpu.memory_space<vmem>>, %arg3: memref<4x1x128xf32, #tpu.memory_space<vmem>>, %arg4: memref<128x128xf32, #tpu.memory_space<vmem>>) attributes {dimension_semantics = [#tpu.dimension_semantics<parallel>], iteration_bounds = array<i64: 2>, scalar_prefetch = 0 : i64, scratch_operands = 0 : i64, tpu.core_type = #tpu.core_type<tc>, window_params = [{transform_indices = @transform_0, window_bounds = array<i64: 128, 128>}, {pipeline_mode = #tpu.pipeline_mode<synchronous>, transform_indices = @transform_1, window_bounds = array<i64: 4, 128, 128>}, {pipeline_mode = #tpu.pipeline_mode<synchronous>, transform_indices = @transform_2, window_bounds = array<i64: 4, 1, 128>}, {transform_indices = @transform_3, window_bounds = array<i64: 128, 128>}]} {
    %c0 = arith.constant 0 : index
    %c0_0 = arith.constant 0 : index
    %0 = vector.load %arg1[%c0, %c0_0] : memref<128x128xbf16, #tpu.memory_space<vmem>>, vector<128x128xbf16>
    %c0_1 = arith.constant 0 : index
    %c0_2 = arith.constant 0 : index
    %c0_3 = arith.constant 0 : index
    %1 = vector.load %arg2[%c0_1, %c0_2, %c0_3] : memref<4x128x128xbf16, #tpu.memory_space<vmem>>, vector<1x128x128xbf16>
    %2 = vector.shape_cast %1 : vector<1x128x128xbf16> to vector<128x128xbf16>
    %cst = arith.constant dense<0.000000e+00> : vector<128x128xf32>
    %3 = tpu.matmul %0, %2, %cst {dimension_numbers = #tpu.dot_dimension_numbers<[1], [0], [0], [1], [0, 0, 1, 1], [], []>} : vector<128x128xbf16>, vector<128x128xbf16>, vector<128x128xf32> -> vector<128x128xf32>
    %c0_4 = arith.constant 0 : index
    %c0_5 = arith.constant 0 : index
    %c0_6 = arith.constant 0 : index
    %4 = vector.load %arg3[%c0_4, %c0_5, %c0_6] : memref<4x1x128xf32, #tpu.memory_space<vmem>>, vector<1x1x128xf32>
    %5 = vector.shape_cast %4 : vector<1x1x128xf32> to vector<1x128xf32>
    %6 = vector.broadcast %5 : vector<1x128xf32> to vector<128x128xf32>
    %7 = arith.addf %3, %6 : vector<128x128xf32>
    %cst_7 = arith.constant 0.000000e+00 : f32
    %8 = vector.broadcast %cst_7 : f32 to vector<128x128xf32>
    %9 = arith.maximumf %7, %8 : vector<128x128xf32>
    %10 = arith.truncf %9 : vector<128x128xf32> to vector<128x128xbf16>
    %c1 = arith.constant 1 : index
    %c0_8 = arith.constant 0 : index
    %c0_9 = arith.constant 0 : index
    %11 = vector.load %arg2[%c1, %c0_8, %c0_9] : memref<4x128x128xbf16, #tpu.memory_space<vmem>>, vector<1x128x128xbf16>
    %12 = vector.shape_cast %11 : vector<1x128x128xbf16> to vector<128x128xbf16>
    %cst_10 = arith.constant dense<0.000000e+00> : vector<128x128xf32>
    %13 = tpu.matmul %10, %12, %cst_10 {dimension_numbers = #tpu.dot_dimension_numbers<[1], [0], [0], [1], [0, 0, 1, 1], [], []>} : vector<128x128xbf16>, vector<128x128xbf16>, vector<128x128xf32> -> vector<128x128xf32>
    %c1_11 = arith.constant 1 : index
    %c0_12 = arith.constant 0 : index
    %c0_13 = arith.constant 0 : index
    %14 = vector.load %arg3[%c1_11, %c0_12, %c0_13] : memref<4x1x128xf32, #tpu.memory_space<vmem>>, vector<1x1x128xf32>
    %15 = vector.shape_cast %14 : vector<1x1x128xf32> to vector<1x128xf32>
    %16 = vector.broadcast %15 : vector<1x128xf32> to vector<128x128xf32>
    %17 = arith.addf %13, %16 : vector<128x128xf32>
    %cst_14 = arith.constant 0.000000e+00 : f32
    %18 = vector.broadcast %cst_14 : f32 to vector<128x128xf32>
    %19 = arith.maximumf %17, %18 : vector<128x128xf32>
    %20 = arith.truncf %19 : vector<128x128xf32> to vector<128x128xbf16>
    %c2 = arith.constant 2 : index
    %c0_15 = arith.constant 0 : index
    %c0_16 = arith.constant 0 : index
    %21 = vector.load %arg2[%c2, %c0_15, %c0_16] : memref<4x128x128xbf16, #tpu.memory_space<vmem>>, vector<1x128x128xbf16>
    %22 = vector.shape_cast %21 : vector<1x128x128xbf16> to vector<128x128xbf16>
    %cst_17 = arith.constant dense<0.000000e+00> : vector<128x128xf32>
    %23 = tpu.matmul %20, %22, %cst_17 {dimension_numbers = #tpu.dot_dimension_numbers<[1], [0], [0], [1], [0, 0, 1, 1], [], []>} : vector<128x128xbf16>, vector<128x128xbf16>, vector<128x128xf32> -> vector<128x128xf32>
    %c2_18 = arith.constant 2 : index
    %c0_19 = arith.constant 0 : index
    %c0_20 = arith.constant 0 : index
    %24 = vector.load %arg3[%c2_18, %c0_19, %c0_20] : memref<4x1x128xf32, #tpu.memory_space<vmem>>, vector<1x1x128xf32>
    %25 = vector.shape_cast %24 : vector<1x1x128xf32> to vector<1x128xf32>
    %26 = vector.broadcast %25 : vector<1x128xf32> to vector<128x128xf32>
    %27 = arith.addf %23, %26 : vector<128x128xf32>
    %cst_21 = arith.constant 0.000000e+00 : f32
    %28 = vector.broadcast %cst_21 : f32 to vector<128x128xf32>
    %29 = arith.maximumf %27, %28 : vector<128x128xf32>
    %30 = arith.truncf %29 : vector<128x128xf32> to vector<128x128xbf16>
    %c3 = arith.constant 3 : index
    %c0_22 = arith.constant 0 : index
    %c0_23 = arith.constant 0 : index
    %31 = vector.load %arg2[%c3, %c0_22, %c0_23] : memref<4x128x128xbf16, #tpu.memory_space<vmem>>, vector<1x128x128xbf16>
    %32 = vector.shape_cast %31 : vector<1x128x128xbf16> to vector<128x128xbf16>
    %cst_24 = arith.constant dense<0.000000e+00> : vector<128x128xf32>
    %33 = tpu.matmul %30, %32, %cst_24 {dimension_numbers = #tpu.dot_dimension_numbers<[1], [0], [0], [1], [0, 0, 1, 1], [], []>} : vector<128x128xbf16>, vector<128x128xbf16>, vector<128x128xf32> -> vector<128x128xf32>
    %c3_25 = arith.constant 3 : index
    %c0_26 = arith.constant 0 : index
    %c0_27 = arith.constant 0 : index
    %34 = vector.load %arg3[%c3_25, %c0_26, %c0_27] : memref<4x1x128xf32, #tpu.memory_space<vmem>>, vector<1x1x128xf32>
    %35 = vector.shape_cast %34 : vector<1x1x128xf32> to vector<1x128xf32>
    %36 = vector.broadcast %35 : vector<1x128xf32> to vector<128x128xf32>
    %37 = arith.addf %33, %36 : vector<128x128xf32>
    %c0_28 = arith.constant 0 : index
    %c0_29 = arith.constant 0 : index
    %38 = vector.load %arg4[%c0_28, %c0_29] : memref<128x128xf32, #tpu.memory_space<vmem>>, vector<128x128xf32>
    tpu.vector_store %arg4[%c0_28, %c0_29], %37 {strides = array<i32>} : memref<128x128xf32, #tpu.memory_space<vmem>>, vector<128x128xf32>,
    return
  }
  func.func @transform_0(%arg0: i32) -> (i32, i32) {
    %c0_i32 = arith.constant 0 : i32
    %c0_i32_0 = arith.constant 0 : i32
    return %arg0, %c0_i32 : i32, i32
  }
  func.func @transform_1(%arg0: i32) -> (i32, i32, i32) {
    %c0_i32 = arith.constant 0 : i32
    %c0_i32_0 = arith.constant 0 : i32
    %c0_i32_1 = arith.constant 0 : i32
    %c0_i32_2 = arith.constant 0 : i32
    return %c0_i32, %c0_i32_0, %c0_i32_1 : i32, i32, i32
  }
  func.func @transform_2(%arg0: i32) -> (i32, i32, i32) {
    %c0_i32 = arith.constant 0 : i32
    %c0_i32_0 = arith.constant 0 : i32
    %c0_i32_1 = arith.constant 0 : i32
    %c0_i32_2 = arith.constant 0 : i32
    return %c0_i32, %c0_i32_0, %c0_i32_1 : i32, i32, i32
  }
  func.func @transform_3(%arg0: i32) -> (i32, i32) {
    %c0_i32 = arith.constant 0 : i32
    %c0_i32_0 = arith.constant 0 : i32
    return %arg0, %c0_i32 : i32, i32
  }
}

</mosaic_0001>

<llo_original>
// kernel: tpu_custom_call.1
$region0: #{tpu_custom_call.1}
  #allocation0 [shape = 'u32[]', space=smem, size = 0x4, offset = 0x4, fixed_abs, tag = 'smem constant byte address 0x4 - core index']
  #allocation1 [shape = 'u32[144,128]{1,0:T(1,128)}', space=vmem, size = 0x12000, scoped, tag = 'internal scratch']
  %s0 = inlined_call_operand.hbm [shape: bf16[256,128], index: 0, kind: input, shape index: {}]
  %s1 = inlined_call_operand.hbm [shape: bf16[4,128,128], index: 1, kind: input, shape index: {}]
  %s2 = inlined_call_operand.hbm [shape: f32[4,1,128], index: 2, kind: input, shape index: {}]
  %s3 = inlined_call_operand.hbm [shape: f32[256,128], index: 3, kind: output, shape index: {}]
  %s4 = sld [smem:[#allocation0]]
  $region57: #{tpu_custom_call.1} parent=0
    _
  %s6 = ssub.s32 1, %s4
  %s7 = scalar_select 0, %s6, %s4
  $region1: #{tpu_custom_call.1} parent=0
    #allocation2 [shape = 'u8[65536]{0}', space=vmem, size = 0x10000, scoped, tag = 'input window, operand 0']
    #allocation3 [shape = 's32[2]{0}', space=sflag, size = 0x8, scoped, tag = 'scoped memory for tpu_custom_call.1']
    #allocation4 [shape = 's32[2]{0}', space=sflag, size = 0x8, scoped, tag = 'scoped memory for tpu_custom_call.1']
    #allocation5 [shape = 'u8[131072]{0}', space=vmem, size = 0x20000, scoped, tag = 'input window, operand 1, single buffered']
    #allocation6 [shape = 's32[1]{0}', space=sflag, size = 0x4, scoped, tag = 'scoped memory for tpu_custom_call.1']
    #allocation7 [shape = 'u8[2048]{0}', space=vmem, size = 0x800, scoped, tag = 'input window, operand 2, single buffered']
    #allocation8 [shape = 'u8[131072]{0}', space=vmem, size = 0x20000, scoped, tag = 'output window, operand 0']
    %8 = vsyncpa [#allocation3], 0
    %s9 = scalar_lea.sflag [#allocation3], 1
    %10 = vsyncpa %s9, 0
    %11 = vsyncpa [#allocation6], 0
    %12 = vsyncpa [#allocation4], 0
    %s13 = scalar_lea.sflag [#allocation4], 1
    %14 = vsyncpa %s13, 0
    loop: start=0, step=1, limit=4
    $region2: #{tpu_custom_call.1} parent=1 // loop_pre_header
      _
    $region3: #{tpu_custom_call.1} parent=1 // loop_header
      %s16 = sphi 0, %s20
      %p17 = scmp.ge.s32.totalorder %s16, 4
      %s26 = sphi 0, %s28
      %s29 = sphi 0, %s26
      %s30 = sphi 0, %s29
      %s46 = sphi 0, %s30
      %s50 = sphi 0, %s50
      %s52 = sphi 0, %s50
      %s53 = sphi 0, %s52
      %s67 = sphi 0, %s53
      %s71 = sphi 0, %s71
      %s73 = sphi 0, %s71
      %s74 = sphi 0, %s73
      %s88 = sphi 0, %s74
      %s94 = sphi 0, %s96
      %s97 = sphi 0, %s94
      %s98 = sphi 0, %s97
      %s114 = sphi 0, %s98
    $region4: #{tpu_custom_call.1} parent=1 // loop_header_branch
      %19 = sbr.rel (%p17) target = $region8
    $region5: #{tpu_custom_call.1} parent=1 // loop_body
      %s21 = ssub.s32 %s16, 1
      %s22 = ssub.s32 %s16, 2
      %s23 = sadd.s32 %s16, 1
      %s24 = ssub.s32 %s16, %s23
      %p25 = scmp.eq.s32.totalorder %s24, 0
      %s27 = sadd.s32 %s26, 1
      %s28 = scalar_select %p25, %s26, %s27
      %p31 = pneg %p25
      %p32 = scmp.eq.s32.totalorder %s16, 1
      %p33 = por %p31, %p32
      %p34 = scmp.ne.s32.totalorder %s26, %s29
      %p35 = scmp.eq.s32.totalorder %s16, 0
      %p36 = por %p34, %p35
      %p37 = scmp.ne.s32.totalorder %s26, %s29
      %p38 = scmp.eq.s32.totalorder %s21, 1
      %p39 = por %p37, %p38
      %p40 = scmp.ne.s32.totalorder %s29, %s30
      %p41 = scmp.eq.s32.totalorder %s21, 0
      %p42 = por %p40, %p41
      %p43 = scmp.ne.s32.totalorder %s29, %s30
      %p44 = scmp.eq.s32.totalorder %s22, 1
      %p45 = por %p43, %p44
      %p47 = scmp.ne.s32.totalorder %s30, %s46
      %p48 = scmp.eq.s32.totalorder %s22, 0
      %p49 = por %p47, %p48
      %s51 = sadd.s32 %s50, 1
      %p54 = scmp.eq.s32.totalorder %s16, 1
      %p55 = scmp.ne.s32.totalorder %s50, %s52
      %p56 = scmp.eq.s32.totalorder %s16, 0
      %p57 = por %p55, %p56
      %p58 = scmp.ne.s32.totalorder %s50, %s52
      %p59 = scmp.eq.s32.totalorder %s21, 1
      %p60 = por %p58, %p59
      %p61 = scmp.ne.s32.totalorder %s52, %s53
      %p62 = scmp.eq.s32.totalorder %s21, 0
      %p63 = por %p61, %p62
      %p64 = scmp.ne.s32.totalorder %s52, %s53
      %p65 = scmp.eq.s32.totalorder %s22, 1
      %p66 = por %p64, %p65
      %p68 = scmp.ne.s32.totalorder %s53, %s67
      %p69 = scmp.eq.s32.totalorder %s22, 0
      %p70 = por %p68, %p69
      %s72 = sadd.s32 %s71, 1
      %p75 = scmp.eq.s32.totalorder %s16, 1
      %p76 = scmp.ne.s32.totalorder %s71, %s73
      %p77 = scmp.eq.s32.totalorder %s16, 0
      %p78 = por %p76, %p77
      %p79 = scmp.ne.s32.totalorder %s71, %s73
      %p80 = scmp.eq.s32.totalorder %s21, 1
      %p81 = por %p79, %p80
      %p82 = scmp.ne.s32.totalorder %s73, %s74
      %p83 = scmp.eq.s32.totalorder %s21, 0
      %p84 = por %p82, %p83
      %p85 = scmp.ne.s32.totalorder %s73, %s74
      %p86 = scmp.eq.s32.totalorder %s22, 1
      %p87 = por %p85, %p86
      %p89 = scmp.ne.s32.totalorder %s74, %s88
      %p90 = scmp.eq.s32.totalorder %s22, 0
      %p91 = por %p89, %p90
      %s92 = ssub.s32 %s16, %s23
      %p93 = scmp.eq.s32.totalorder %s92, 0
      %s95 = sadd.s32 %s94, 1
      %s96 = scalar_select %p93, %s94, %s95
      %p99 = pneg %p93
      %p100 = scmp.eq.s32.totalorder %s16, 1
      %p101 = por %p99, %p100
      %p102 = scmp.ne.s32.totalorder %s94, %s97
      %p103 = scmp.eq.s32.totalorder %s16, 0
      %p104 = por %p102, %p103
      %p105 = scmp.ne.s32.totalorder %s94, %s97
      %p106 = scmp.eq.s32.totalorder %s21, 1
      %p107 = por %p105, %p106
      %p108 = scmp.ne.s32.totalorder %s97, %s98
      %p109 = scmp.eq.s32.totalorder %s21, 0
      %p110 = por %p108, %p109
      %p111 = scmp.ne.s32.totalorder %s97, %s98
      %p112 = scmp.eq.s32.totalorder %s22, 1
      %p113 = por %p111, %p112
      %p115 = scmp.ne.s32.totalorder %s98, %s114
      %p116 = scmp.eq.s32.totalorder %s22, 0
      %p117 = por %p115, %p116
      %p118 = scmp.le.s32.totalorder 1, %s16
      %p119 = scmp.lt.s32.totalorder %s16, 3
      %p120 = pnand %p118, %p119
      %p121 = pneg %p120
      // Predicated region
      $region9: #{tpu_custom_call.1} parent=5 // pred_check
        _
      $region10: #{tpu_custom_call.1} parent=5 // pred_check_branch
        %123 = sbr.rel (%p120) target = $region12
      $region11: #{tpu_custom_call.1} parent=5 // pred_region
        %s124 = ssub.s32 %s16, 1
        // Predicated region
        $region13: #{tpu_custom_call.1} parent=11 // pred_check
          %p125 = pneg %p63
        $region14: #{tpu_custom_call.1} parent=11 // pred_check_branch
          %127 = sbr.rel (%p125) target = $region16
        $region15: #{tpu_custom_call.1} parent=11 // pred_region
          %s129 = ssub.s32 4096, 4096
          %130 = vsyncadd [#allocation6], %s129
          %s131 = sshll.u32 [#allocation5], 4
          %s132 = int_to_ptr.vmem [resolvable:$true] %s131
          %137 = dma.hbm_to_vmem [thread:$0]  %s1, 4096, %s132, [#allocation6], 64, 64, 4
        $region16: #{tpu_custom_call.1} parent=11 // pred_fallthru
          _
        // Predicated region
        $region17: #{tpu_custom_call.1} parent=11 // pred_check
          %p138 = pneg %p84
        $region18: #{tpu_custom_call.1} parent=11 // pred_check_branch
          %140 = sbr.rel (%p138) target = $region20
        $region19: #{tpu_custom_call.1} parent=11 // pred_region
          %s142 = ssub.s32 64, 64
          %143 = vsyncadd [#allocation6], %s142
          %s144 = sshll.u32 [#allocation7], 4
          %s145 = int_to_ptr.vmem [resolvable:$true] %s144
          %150 = dma.hbm_to_vmem [thread:$0]  %s2, 64, %s145, [#allocation6], 16, 16, 1
        $region20: #{tpu_custom_call.1} parent=11 // pred_fallthru
          _
      $region12: #{tpu_custom_call.1} parent=5 // pred_fallthru
        _
      %p151 = scmp.lt.s32.totalorder %s16, 2
      // Predicated region
      $region21: #{tpu_custom_call.1} parent=5 // pred_check
        %p152 = pneg %p151
      $region22: #{tpu_custom_call.1} parent=5 // pred_check_branch
        %154 = sbr.rel (%p152) target = $region24
      $region23: #{tpu_custom_call.1} parent=5 // pred_region
        // Predicated region
        $region25: #{tpu_custom_call.1} parent=23 // pred_check
          %p155 = pneg %p36
        $region26: #{tpu_custom_call.1} parent=23 // pred_check_branch
          %157 = sbr.rel (%p155) target = $region28
        $region27: #{tpu_custom_call.1} parent=23 // pred_region
          %s158 = sand.u32 %s26, 1
          %s159 = scalar_lea.sflag [#allocation3], %s158
          %s160 = sand.u32 %s26, 1
          %s161 = smul.addr %s160, 64
          %s162 = scalar_lea.vmem [#allocation2], %s161
          %s163 = smul.u32 16, %s16
          %s165 = ssub.s32 1024, 1024
          %166 = vsyncadd %s159, %s165
          %s167 = smul.addr %s163, 64
          %s168 = scalar_lea.hbm %s0, %s167
          %s169 = sshll.u32 %s162, 4
          %s170 = int_to_ptr.vmem [resolvable:$true] %s169
          %175 = dma.hbm_to_vmem [thread:$0]  %s168, 1024, %s170, %s159, 64, 64, 4
        $region28: #{tpu_custom_call.1} parent=23 // pred_fallthru
          _
      $region24: #{tpu_custom_call.1} parent=5 // pred_fallthru
        _
      %p176 = scmp.le.s32.totalorder 1, %s16
      %p177 = scmp.lt.s32.totalorder %s16, 3
      %p178 = pnand %p176, %p177
      %p179 = pneg %p178
      // Predicated region
      $region29: #{tpu_custom_call.1} parent=5 // pred_check
        _
      $region30: #{tpu_custom_call.1} parent=5 // pred_check_branch
        %181 = sbr.rel (%p178) target = $region32
      $region31: #{tpu_custom_call.1} parent=5 // pred_region
        %s182 = ssub.s32 %s16, 1
        %s183 = sand.u32 %s29, 1
        %s184 = scalar_lea.sflag [#allocation3], %s183
        %s185 = sand.u32 %s29, 1
        %s186 = smul.addr %s185, 64
        %s187 = scalar_lea.vmem [#allocation2], %s186
        // Predicated region
        $region33: #{tpu_custom_call.1} parent=31 // pred_check
          %p188 = pneg %p42
        $region34: #{tpu_custom_call.1} parent=31 // pred_check_branch
          %190 = sbr.rel (%p188) target = $region36
        $region35: #{tpu_custom_call.1} parent=31 // pred_region
          %191 = dma.done %s184, 1024
        $region36: #{tpu_custom_call.1} parent=31 // pred_fallthru
          _
        // Predicated region
        $region37: #{tpu_custom_call.1} parent=31 // pred_check
          %p192 = pneg %p63
        $region38: #{tpu_custom_call.1} parent=31 // pred_check_branch
          %194 = sbr.rel (%p192) target = $region40
        $region39: #{tpu_custom_call.1} parent=31 // pred_region
          %195 = dma.done [#allocation6], 4096
        $region40: #{tpu_custom_call.1} parent=31 // pred_fallthru
          _
        // Predicated region
        $region41: #{tpu_custom_call.1} parent=31 // pred_check
          %p196 = pneg %p84
        $region42: #{tpu_custom_call.1} parent=31 // pred_check_branch
          %198 = sbr.rel (%p196) target = $region44
        $region43: #{tpu_custom_call.1} parent=31 // pred_region
          %199 = dma.done [#allocation6], 64
        $region44: #{tpu_custom_call.1} parent=31 // pred_fallthru
          _
        %s200 = sand.u32 %s29, 1
        %s201 = scalar_lea.sflag [#allocation3], %s200
        %s202 = sand.u32 %s29, 1
        %s203 = smul.addr %s202, 64
        %s204 = scalar_lea.vmem [#allocation2], %s203
        %p205 = pneg %p42
        %p206 = pneg %p39
        %p207 = pneg %p63
        %p208 = pneg %p60
        %p209 = pneg %p84
        %p210 = pneg %p81
        %p211 = pneg %p110
        %p212 = pneg %p107
        %s213 = sand.u32 %s97, 1
        %s214 = scalar_lea.sflag [#allocation4], %s213
        %s215 = sand.u32 %s97, 1
        %s216 = smul.addr %s215, 128
        %s217 = scalar_lea.vmem [#allocation8], %s216
        %s218 = smul.u32 16, %s21
        %s219 = smul.u32 16, %s21
        %v221 = vld [vmem:[%s187] sm:$0xf]
        %v222 = vld [vmem:[%s187 + $0x4] sm:$0xf]
        %v223 = vld [vmem:[%s187 + $0x8] sm:$0xf]
        %v224 = vld [vmem:[%s187 + $0xc] sm:$0xf]
        %v225 = vld [vmem:[%s187 + $0x10] sm:$0xf]
        %v226 = vld [vmem:[%s187 + $0x14] sm:$0xf]
        %v227 = vld [vmem:[%s187 + $0x18] sm:$0xf]
        %v228 = vld [vmem:[%s187 + $0x1c] sm:$0xf]
        %v229 = vld [vmem:[%s187 + $0x20] sm:$0xf]
        %v230 = vld [vmem:[%s187 + $0x24] sm:$0xf]
        %v231 = vld [vmem:[%s187 + $0x28] sm:$0xf]
        %v232 = vld [vmem:[%s187 + $0x2c] sm:$0xf]
        %v233 = vld [vmem:[%s187 + $0x30] sm:$0xf]
        %v234 = vld [vmem:[%s187 + $0x34] sm:$0xf]
        %v235 = vld [vmem:[%s187 + $0x38] sm:$0xf]
        %v236 = vld [vmem:[%s187 + $0x3c] sm:$0xf]
        %v237 = vld [vmem:[#allocation5] sm:$0xf]
        %v238 = vld [vmem:[#allocation5 + $0x4] sm:$0xf]
        %v239 = vld [vmem:[#allocation5 + $0x8] sm:$0xf]
        %v240 = vld [vmem:[#allocation5 + $0xc] sm:$0xf]
        %v241 = vld [vmem:[#allocation5 + $0x10] sm:$0xf]
        %v242 = vld [vmem:[#allocation5 + $0x14] sm:$0xf]
        %v243 = vld [vmem:[#allocation5 + $0x18] sm:$0xf]
        %v244 = vld [vmem:[#allocation5 + $0x1c] sm:$0xf]
        %v245 = vld [vmem:[#allocation5 + $0x20] sm:$0xf]
        %v246 = vld [vmem:[#allocation5 + $0x24] sm:$0xf]
        %v247 = vld [vmem:[#allocation5 + $0x28] sm:$0xf]
        %v248 = vld [vmem:[#allocation5 + $0x2c] sm:$0xf]
        %v249 = vld [vmem:[#allocation5 + $0x30] sm:$0xf]
        %v250 = vld [vmem:[#allocation5 + $0x34] sm:$0xf]
        %v251 = vld [vmem:[#allocation5 + $0x38] sm:$0xf]
        %v252 = vld [vmem:[#allocation5 + $0x3c] sm:$0xf]
        %v253 = vld [vmem:[#allocation7] sm:$0x1]
        %v255 = vlaneseq
        %v256 = vshrl.u32 %v255, 7
        %v257 = vsub.s32 0, %v256
        %v258 = vrot.slane %v253, %v257
        %v276 = vunpack.c.l.b16 %v221
        %v277 = vunpack.c.l.b16 %v222
        %v278 = vunpack.c.l.b16 %v223
        %v279 = vunpack.c.l.b16 %v224
        %v280 = vunpack.c.l.b16 %v225
        %v281 = vunpack.c.l.b16 %v226
        %v282 = vunpack.c.l.b16 %v227
        %v283 = vunpack.c.l.b16 %v228
        %v284 = vunpack.c.l.b16 %v229
        %v285 = vunpack.c.l.b16 %v230
        %v286 = vunpack.c.l.b16 %v231
        %v287 = vunpack.c.l.b16 %v232
        %v288 = vunpack.c.l.b16 %v233
        %v289 = vunpack.c.l.b16 %v234
        %v290 = vunpack.c.l.b16 %v235
        %v291 = vunpack.c.l.b16 %v236
        %v292 = vpack.c.b16 %v277, %v276
        %v293 = vpack.c.b16 %v279, %v278
        %v294 = vpack.c.b16 %v281, %v280
        %v295 = vpack.c.b16 %v283, %v282
        %v296 = vpack.c.b16 %v285, %v284
        %v297 = vpack.c.b16 %v287, %v286
        %v298 = vpack.c.b16 %v289, %v288
        %v299 = vpack.c.b16 %v291, %v290
        %v324 = vunpack.c.l.b16 %v237
        %v325 = vunpack.c.l.b16 %v238
        %v326 = vunpack.c.l.b16 %v239
        %v327 = vunpack.c.l.b16 %v240
        %v328 = vunpack.c.l.b16 %v241
        %v329 = vunpack.c.l.b16 %v242
        %v330 = vunpack.c.l.b16 %v243
        %v331 = vunpack.c.l.b16 %v244
        %v332 = vunpack.c.l.b16 %v245
        %v333 = vunpack.c.l.b16 %v246
        %v334 = vunpack.c.l.b16 %v247
        %v335 = vunpack.c.l.b16 %v248
        %v336 = vunpack.c.l.b16 %v249
        %v337 = vunpack.c.l.b16 %v250
        %v338 = vunpack.c.l.b16 %v251
        %v339 = vunpack.c.l.b16 %v252
        %v340 = vpack.c.b16 %v325, %v324
        %v341 = vpack.c.b16 %v327, %v326
        %v342 = vpack.c.b16 %v329, %v328
        %v343 = vpack.c.b16 %v331, %v330
        %v344 = vpack.c.b16 %v333, %v332
        %v345 = vpack.c.b16 %v335, %v334
        %v346 = vpack.c.b16 %v337, %v336
        %v347 = vpack.c.b16 %v339, %v338
        %356 = vmatprep.subr.bf16.mxu0 0
        %357 = vmatpush1.bf16.msra.mxu0 %v347
        %358 = vmatprep.subr.bf16.mxu0 0
        %359 = vmatpush1.bf16.msra.mxu0 %v346
        %360 = vmatprep.subr.bf16.mxu0 0
        %361 = vmatpush1.bf16.msra.mxu0 %v345
        %362 = vmatprep.subr.bf16.mxu0 0
        %363 = vmatpush1.bf16.msra.mxu0 %v344
        %364 = vmatprep.subr.bf16.mxu0 0
        %365 = vmatpush1.bf16.msra.mxu0 %v343
        %366 = vmatprep.subr.bf16.mxu0 0
        %367 = vmatpush1.bf16.msra.mxu0 %v342
        %368 = vmatprep.subr.bf16.mxu0 0
        %369 = vmatpush1.bf16.msra.mxu0 %v341
        %370 = vmatprep.subr.bf16.mxu0 0
        %371 = vmatpush1.bf16.msra.mxu0 %v340
        %372 = vmatprep.subr.bf16.mxu0 0
        %373 = vmatpush2.bf16.msra.mxu0 0
        %374 = vmatprep.subr.bf16.mxu0 0
        %375 = vmatpush2.bf16.msra.mxu0 0
        %376 = vmatprep.subr.bf16.mxu0 0
        %377 = vmatpush2.bf16.msra.mxu0 0
        %378 = vmatprep.subr.bf16.mxu0 0
        %379 = vmatpush2.bf16.msra.mxu0 0
        %380 = vmatprep.subr.bf16.mxu0 0
        %381 = vmatpush2.bf16.msra.mxu0 0
        %382 = vmatprep.subr.bf16.mxu0 0
        %383 = vmatpush2.bf16.msra.mxu0 0
        %384 = vmatprep.subr.bf16.mxu0 0
        %385 = vmatpush2.bf16.msra.mxu0 0
        %386 = vmatprep.subr.bf16.mxu0 0
        %387 = vmatpush2.bf16.msra.mxu0 0
        %388 = vmatprep.mubr.bf16.mxu0 0
        %389 = vmatmul.mubr.bf16.gmra.mxu0 %v292
        %v390 = vpop.f32.mrf.mxu0
        %v391 = vadd.f32 %v258, %v390
        %v392 = vpop.f32.mrf.mxu0
        %v393 = vpop.f32.mrf.mxu0
        %v394 = vadd.f32 %v258, %v393
        %v395 = vpop.f32.mrf.mxu0
        %396 = vmatprep.mubr.bf16.mxu0 0
        %397 = vmatmul.mubr.bf16.gmra.mxu0 %v293
        %v398 = vpop.f32.mrf.mxu0
        %v399 = vadd.f32 %v258, %v398
        %v400 = vpop.f32.mrf.mxu0
        %v401 = vpop.f32.mrf.mxu0
        %v402 = vadd.f32 %v258, %v401
        %v403 = vpop.f32.mrf.mxu0
        %404 = vmatprep.mubr.bf16.mxu0 0
        %405 = vmatmul.mubr.bf16.gmra.mxu0 %v294
        %v406 = vpop.f32.mrf.mxu0
        %v407 = vadd.f32 %v258, %v406
        %v408 = vpop.f32.mrf.mxu0
        %v409 = vpop.f32.mrf.mxu0
        %v410 = vadd.f32 %v258, %v409
        %v411 = vpop.f32.mrf.mxu0
        %412 = vmatprep.mubr.bf16.mxu0 0
        %413 = vmatmul.mubr.bf16.gmra.mxu0 %v295
        %v414 = vpop.f32.mrf.mxu0
        %v415 = vadd.f32 %v258, %v414
        %v416 = vpop.f32.mrf.mxu0
        %v417 = vpop.f32.mrf.mxu0
        %v418 = vadd.f32 %v258, %v417
        %v419 = vpop.f32.mrf.mxu0
        %420 = vmatprep.mubr.bf16.mxu0 0
        %421 = vmatmul.mubr.bf16.gmra.mxu0 %v296
        %v422 = vpop.f32.mrf.mxu0
        %v423 = vadd.f32 %v258, %v422
        %v424 = vpop.f32.mrf.mxu0
        %v425 = vpop.f32.mrf.mxu0
        %v426 = vadd.f32 %v258, %v425
        %v427 = vpop.f32.mrf.mxu0
        %428 = vmatprep.mubr.bf16.mxu0 0
        %429 = vmatmul.mubr.bf16.gmra.mxu0 %v297
        %v430 = vpop.f32.mrf.mxu0
        %v431 = vadd.f32 %v258, %v430
        %v432 = vpop.f32.mrf.mxu0
        %v433 = vpop.f32.mrf.mxu0
        %v434 = vadd.f32 %v258, %v433
        %v435 = vpop.f32.mrf.mxu0
        %436 = vmatprep.mubr.bf16.mxu0 0
        %437 = vmatmul.mubr.bf16.gmra.mxu0 %v298
        %v438 = vpop.f32.mrf.mxu0
        %v439 = vadd.f32 %v258, %v438
        %v440 = vpop.f32.mrf.mxu0
        %v441 = vpop.f32.mrf.mxu0
        %v442 = vadd.f32 %v258, %v441
        %v443 = vpop.f32.mrf.mxu0
        %444 = vmatprep.mubr.bf16.mxu0 0
        %445 = vmatmul.mubr.bf16.gmra.mxu0 %v299
        %v446 = vpop.f32.mrf.mxu0
        %v447 = vadd.f32 %v258, %v446
        %v448 = vpop.f32.mrf.mxu0
        %v449 = vpop.f32.mrf.mxu0
        %v450 = vadd.f32 %v258, %v449
        %v451 = vpop.f32.mrf.mxu0
        %452 = vdwg.mxu0
        %v453 = vmax.f32 %v391, 0.0
        %v454 = vmax.f32 %v394, 0.0
        %v455 = vmax.f32 %v399, 0.0
        %v456 = vmax.f32 %v402, 0.0
        %v457 = vmax.f32 %v407, 0.0
        %v458 = vmax.f32 %v410, 0.0
        %v459 = vmax.f32 %v415, 0.0
        %v460 = vmax.f32 %v418, 0.0
        %v461 = vmax.f32 %v423, 0.0
        %v462 = vmax.f32 %v426, 0.0
        %v463 = vmax.f32 %v431, 0.0
        %v464 = vmax.f32 %v434, 0.0
        %v465 = vmax.f32 %v439, 0.0
        %v466 = vmax.f32 %v442, 0.0
        %v467 = vmax.f32 %v447, 0.0
        %v468 = vmax.f32 %v450, 0.0
        %v469 = vpack.c.bf16 %v454, %v453
        %v470 = vpack.c.bf16 %v456, %v455
        %v471 = vpack.c.bf16 %v458, %v457
        %v472 = vpack.c.bf16 %v460, %v459
        %v473 = vpack.c.bf16 %v462, %v461
        %v474 = vpack.c.bf16 %v464, %v463
        %v475 = vpack.c.bf16 %v466, %v465
        %v476 = vpack.c.bf16 %v468, %v467
        %s477 = scalar_lea.vmem [#allocation5], 64
        %v478 = vld [vmem:[%s477] sm:$0xf]
        %v479 = vld [vmem:[%s477 + $0x4] sm:$0xf]
        %v480 = vld [vmem:[%s477 + $0x8] sm:$0xf]
        %v481 = vld [vmem:[%s477 + $0xc] sm:$0xf]
        %v482 = vld [vmem:[%s477 + $0x10] sm:$0xf]
        %v483 = vld [vmem:[%s477 + $0x14] sm:$0xf]
        %v484 = vld [vmem:[%s477 + $0x18] sm:$0xf]
        %v485 = vld [vmem:[%s477 + $0x1c] sm:$0xf]
        %v486 = vld [vmem:[%s477 + $0x20] sm:$0xf]
        %v487 = vld [vmem:[%s477 + $0x24] sm:$0xf]
        %v488 = vld [vmem:[%s477 + $0x28] sm:$0xf]
        %v489 = vld [vmem:[%s477 + $0x2c] sm:$0xf]
        %v490 = vld [vmem:[%s477 + $0x30] sm:$0xf]
        %v491 = vld [vmem:[%s477 + $0x34] sm:$0xf]
        %v492 = vld [vmem:[%s477 + $0x38] sm:$0xf]
        %v493 = vld [vmem:[%s477 + $0x3c] sm:$0xf]
        %s494 = scalar_lea.vmem [#allocation7], 1
        %v495 = vld [vmem:[%s494] sm:$0x1]
        %v497 = vlaneseq
        %v498 = vshrl.u32 %v497, 7
        %v499 = vsub.s32 0, %v498
        %v500 = vrot.slane %v495, %v499
        %v518 = vunpack.c.l.b16 %v478
        %v519 = vunpack.c.l.b16 %v479
        %v520 = vunpack.c.l.b16 %v480
        %v521 = vunpack.c.l.b16 %v481
        %v522 = vunpack.c.l.b16 %v482
        %v523 = vunpack.c.l.b16 %v483
        %v524 = vunpack.c.l.b16 %v484
        %v525 = vunpack.c.l.b16 %v485
        %v526 = vunpack.c.l.b16 %v486
        %v527 = vunpack.c.l.b16 %v487
        %v528 = vunpack.c.l.b16 %v488
        %v529 = vunpack.c.l.b16 %v489
        %v530 = vunpack.c.l.b16 %v490
        %v531 = vunpack.c.l.b16 %v491
        %v532 = vunpack.c.l.b16 %v492
        %v533 = vunpack.c.l.b16 %v493
        %v534 = vpack.c.b16 %v519, %v518
        %v535 = vpack.c.b16 %v521, %v520
        %v536 = vpack.c.b16 %v523, %v522
        %v537 = vpack.c.b16 %v525, %v524
        %v538 = vpack.c.b16 %v527, %v526
        %v539 = vpack.c.b16 %v529, %v528
        %v540 = vpack.c.b16 %v531, %v530
        %v541 = vpack.c.b16 %v533, %v532
        %550 = vmatprep.subr.bf16.mxu0 0
        %551 = vmatpush1.bf16.msra.mxu0 %v541
        %552 = vmatprep.subr.bf16.mxu0 0
        %553 = vmatpush1.bf16.msra.mxu0 %v540
        %554 = vmatprep.subr.bf16.mxu0 0
        %555 = vmatpush1.bf16.msra.mxu0 %v539
        %556 = vmatprep.subr.bf16.mxu0 0
        %557 = vmatpush1.bf16.msra.mxu0 %v538
        %558 = vmatprep.subr.bf16.mxu0 0
        %559 = vmatpush1.bf16.msra.mxu0 %v537
        %560 = vmatprep.subr.bf16.mxu0 0
        %561 = vmatpush1.bf16.msra.mxu0 %v536
        %562 = vmatprep.subr.bf16.mxu0 0
        %563 = vmatpush1.bf16.msra.mxu0 %v535
        %564 = vmatprep.subr.bf16.mxu0 0
        %565 = vmatpush1.bf16.msra.mxu0 %v534
        %566 = vmatprep.subr.bf16.mxu0 0
        %567 = vmatpush2.bf16.msra.mxu0 0
        %568 = vmatprep.subr.bf16.mxu0 0
        %569 = vmatpush2.bf16.msra.mxu0 0
        %570 = vmatprep.subr.bf16.mxu0 0
        %571 = vmatpush2.bf16.msra.mxu0 0
        %572 = vmatprep.subr.bf16.mxu0 0
        %573 = vmatpush2.bf16.msra.mxu0 0
        %574 = vmatprep.subr.bf16.mxu0 0
        %575 = vmatpush2.bf16.msra.mxu0 0
        %576 = vmatprep.subr.bf16.mxu0 0
        %577 = vmatpush2.bf16.msra.mxu0 0
        %578 = vmatprep.subr.bf16.mxu0 0
        %579 = vmatpush2.bf16.msra.mxu0 0
        %580 = vmatprep.subr.bf16.mxu0 0
        %581 = vmatpush2.bf16.msra.mxu0 0
        %582 = vmatprep.mubr.bf16.mxu0 0
        %583 = vmatmul.mubr.bf16.gmra.mxu0 %v469
        %v584 = vpop.f32.mrf.mxu0
        %v585 = vadd.f32 %v500, %v584
        %v586 = vpop.f32.mrf.mxu0
        %v587 = vpop.f32.mrf.mxu0
        %v588 = vadd.f32 %v500, %v587
        %v589 = vpop.f32.mrf.mxu0
        %590 = vmatprep.mubr.bf16.mxu0 0
        %591 = vmatmul.mubr.bf16.gmra.mxu0 %v470
        %v592 = vpop.f32.mrf.mxu0
        %v593 = vadd.f32 %v500, %v592
        %v594 = vpop.f32.mrf.mxu0
        %v595 = vpop.f32.mrf.mxu0
        %v596 = vadd.f32 %v500, %v595
        %v597 = vpop.f32.mrf.mxu0
        %598 = vmatprep.mubr.bf16.mxu0 0
        %599 = vmatmul.mubr.bf16.gmra.mxu0 %v471
        %v600 = vpop.f32.mrf.mxu0
        %v601 = vadd.f32 %v500, %v600
        %v602 = vpop.f32.mrf.mxu0
        %v603 = vpop.f32.mrf.mxu0
        %v604 = vadd.f32 %v500, %v603
        %v605 = vpop.f32.mrf.mxu0
        %606 = vmatprep.mubr.bf16.mxu0 0
        %607 = vmatmul.mubr.bf16.gmra.mxu0 %v472
        %v608 = vpop.f32.mrf.mxu0
        %v609 = vadd.f32 %v500, %v608
        %v610 = vpop.f32.mrf.mxu0
        %v611 = vpop.f32.mrf.mxu0
        %v612 = vadd.f32 %v500, %v611
        %v613 = vpop.f32.mrf.mxu0
        %614 = vmatprep.mubr.bf16.mxu0 0
        %615 = vmatmul.mubr.bf16.gmra.mxu0 %v473
        %v616 = vpop.f32.mrf.mxu0
        %v617 = vadd.f32 %v500, %v616
        %v618 = vpop.f32.mrf.mxu0
        %v619 = vpop.f32.mrf.mxu0
        %v620 = vadd.f32 %v500, %v619
        %v621 = vpop.f32.mrf.mxu0
        %622 = vmatprep.mubr.bf16.mxu0 0
        %623 = vmatmul.mubr.bf16.gmra.mxu0 %v474
        %v624 = vpop.f32.mrf.mxu0
        %v625 = vadd.f32 %v500, %v624
        %v626 = vpop.f32.mrf.mxu0
        %v627 = vpop.f32.mrf.mxu0
        %v628 = vadd.f32 %v500, %v627
        %v629 = vpop.f32.mrf.mxu0
        %630 = vmatprep.mubr.bf16.mxu0 0
        %631 = vmatmul.mubr.bf16.gmra.mxu0 %v475
        %v632 = vpop.f32.mrf.mxu0
        %v633 = vadd.f32 %v500, %v632
        %v634 = vpop.f32.mrf.mxu0
        %v635 = vpop.f32.mrf.mxu0
        %v636 = vadd.f32 %v500, %v635
        %v637 = vpop.f32.mrf.mxu0
        %638 = vmatprep.mubr.bf16.mxu0 0
        %639 = vmatmul.mubr.bf16.gmra.mxu0 %v476
        %v640 = vpop.f32.mrf.mxu0
        %v641 = vadd.f32 %v500, %v640
        %v642 = vpop.f32.mrf.mxu0
        %v643 = vpop.f32.mrf.mxu0
        %v644 = vadd.f32 %v500, %v643
        %v645 = vpop.f32.mrf.mxu0
        %646 = vdwg.mxu0
        %v647 = vmax.f32 %v585, 0.0
        %v648 = vmax.f32 %v588, 0.0
        %v649 = vmax.f32 %v593, 0.0
        %v650 = vmax.f32 %v596, 0.0
        %v651 = vmax.f32 %v601, 0.0
        %v652 = vmax.f32 %v604, 0.0
        %v653 = vmax.f32 %v609, 0.0
        %v654 = vmax.f32 %v612, 0.0
        %v655 = vmax.f32 %v617, 0.0
        %v656 = vmax.f32 %v620, 0.0
        %v657 = vmax.f32 %v625, 0.0
        %v658 = vmax.f32 %v628, 0.0
        %v659 = vmax.f32 %v633, 0.0
        %v660 = vmax.f32 %v636, 0.0
        %v661 = vmax.f32 %v641, 0.0
        %v662 = vmax.f32 %v644, 0.0
        %v663 = vpack.c.bf16 %v648, %v647
        %v664 = vpack.c.bf16 %v650, %v649
        %v665 = vpack.c.bf16 %v652, %v651
        %v666 = vpack.c.bf16 %v654, %v653
        %v667 = vpack.c.bf16 %v656, %v655
        %v668 = vpack.c.bf16 %v658, %v657
        %v669 = vpack.c.bf16 %v660, %v659
        %v670 = vpack.c.bf16 %v662, %v661
        %s671 = scalar_lea.vmem [#allocation5], 128
        %v672 = vld [vmem:[%s671] sm:$0xf]
        %v673 = vld [vmem:[%s671 + $0x4] sm:$0xf]
        %v674 = vld [vmem:[%s671 + $0x8] sm:$0xf]
        %v675 = vld [vmem:[%s671 + $0xc] sm:$0xf]
        %v676 = vld [vmem:[%s671 + $0x10] sm:$0xf]
        %v677 = vld [vmem:[%s671 + $0x14] sm:$0xf]
        %v678 = vld [vmem:[%s671 + $0x18] sm:$0xf]
        %v679 = vld [vmem:[%s671 + $0x1c] sm:$0xf]
        %v680 = vld [vmem:[%s671 + $0x20] sm:$0xf]
        %v681 = vld [vmem:[%s671 + $0x24] sm:$0xf]
        %v682 = vld [vmem:[%s671 + $0x28] sm:$0xf]
        %v683 = vld [vmem:[%s671 + $0x2c] sm:$0xf]
        %v684 = vld [vmem:[%s671 + $0x30] sm:$0xf]
        %v685 = vld [vmem:[%s671 + $0x34] sm:$0xf]
        %v686 = vld [vmem:[%s671 + $0x38] sm:$0xf]
        %v687 = vld [vmem:[%s671 + $0x3c] sm:$0xf]
        %s688 = scalar_lea.vmem [#allocation7], 2
        %v689 = vld [vmem:[%s688] sm:$0x1]
        %v691 = vlaneseq
        %v692 = vshrl.u32 %v691, 7
        %v693 = vsub.s32 0, %v692
        %v694 = vrot.slane %v689, %v693
        %v712 = vunpack.c.l.b16 %v672
        %v713 = vunpack.c.l.b16 %v673
        %v714 = vunpack.c.l.b16 %v674
        %v715 = vunpack.c.l.b16 %v675
        %v716 = vunpack.c.l.b16 %v676
        %v717 = vunpack.c.l.b16 %v677
        %v718 = vunpack.c.l.b16 %v678
        %v719 = vunpack.c.l.b16 %v679
        %v720 = vunpack.c.l.b16 %v680
        %v721 = vunpack.c.l.b16 %v681
        %v722 = vunpack.c.l.b16 %v682
        %v723 = vunpack.c.l.b16 %v683
        %v724 = vunpack.c.l.b16 %v684
        %v725 = vunpack.c.l.b16 %v685
        %v726 = vunpack.c.l.b16 %v686
        %v727 = vunpack.c.l.b16 %v687
        %v728 = vpack.c.b16 %v713, %v712
        %v729 = vpack.c.b16 %v715, %v714
        %v730 = vpack.c.b16 %v717, %v716
        %v731 = vpack.c.b16 %v719, %v718
        %v732 = vpack.c.b16 %v721, %v720
        %v733 = vpack.c.b16 %v723, %v722
        %v734 = vpack.c.b16 %v725, %v724
        %v735 = vpack.c.b16 %v727, %v726
        %744 = vmatprep.subr.bf16.mxu0 0
        %745 = vmatpush1.bf16.msra.mxu0 %v735
        %746 = vmatprep.subr.bf16.mxu0 0
        %747 = vmatpush1.bf16.msra.mxu0 %v734
        %748 = vmatprep.subr.bf16.mxu0 0
        %749 = vmatpush1.bf16.msra.mxu0 %v733
        %750 = vmatprep.subr.bf16.mxu0 0
        %751 = vmatpush1.bf16.msra.mxu0 %v732
        %752 = vmatprep.subr.bf16.mxu0 0
        %753 = vmatpush1.bf16.msra.mxu0 %v731
        %754 = vmatprep.subr.bf16.mxu0 0
        %755 = vmatpush1.bf16.msra.mxu0 %v730
        %756 = vmatprep.subr.bf16.mxu0 0
        %757 = vmatpush1.bf16.msra.mxu0 %v729
        %758 = vmatprep.subr.bf16.mxu0 0
        %759 = vmatpush1.bf16.msra.mxu0 %v728
        %760 = vmatprep.subr.bf16.mxu0 0
        %761 = vmatpush2.bf16.msra.mxu0 0
        %762 = vmatprep.subr.bf16.mxu0 0
        %763 = vmatpush2.bf16.msra.mxu0 0
        %764 = vmatprep.subr.bf16.mxu0 0
        %765 = vmatpush2.bf16.msra.mxu0 0
        %766 = vmatprep.subr.bf16.mxu0 0
        %767 = vmatpush2.bf16.msra.mxu0 0
        %768 = vmatprep.subr.bf16.mxu0 0
        %769 = vmatpush2.bf16.msra.mxu0 0
        %770 = vmatprep.subr.bf16.mxu0 0
        %771 = vmatpush2.bf16.msra.mxu0 0
        %772 = vmatprep.subr.bf16.mxu0 0
        %773 = vmatpush2.bf16.msra.mxu0 0
        %774 = vmatprep.subr.bf16.mxu0 0
        %775 = vmatpush2.bf16.msra.mxu0 0
        %776 = vmatprep.mubr.bf16.mxu0 0
        %777 = vmatmul.mubr.bf16.gmra.mxu0 %v663
        %v778 = vpop.f32.mrf.mxu0
        %v779 = vadd.f32 %v694, %v778
        %v780 = vpop.f32.mrf.mxu0
        %v781 = vpop.f32.mrf.mxu0
        %v782 = vadd.f32 %v694, %v781
        %v783 = vpop.f32.mrf.mxu0
        %784 = vmatprep.mubr.bf16.mxu0 0
        %785 = vmatmul.mubr.bf16.gmra.mxu0 %v664
        %v786 = vpop.f32.mrf.mxu0
        %v787 = vadd.f32 %v694, %v786
        %v788 = vpop.f32.mrf.mxu0
        %v789 = vpop.f32.mrf.mxu0
        %v790 = vadd.f32 %v694, %v789
        %v791 = vpop.f32.mrf.mxu0
        %792 = vmatprep.mubr.bf16.mxu0 0
        %793 = vmatmul.mubr.bf16.gmra.mxu0 %v665
        %v794 = vpop.f32.mrf.mxu0
        %v795 = vadd.f32 %v694, %v794
        %v796 = vpop.f32.mrf.mxu0
        %v797 = vpop.f32.mrf.mxu0
        %v798 = vadd.f32 %v694, %v797
        %v799 = vpop.f32.mrf.mxu0
        %800 = vmatprep.mubr.bf16.mxu0 0
        %801 = vmatmul.mubr.bf16.gmra.mxu0 %v666
        %v802 = vpop.f32.mrf.mxu0
        %v803 = vadd.f32 %v694, %v802
        %v804 = vpop.f32.mrf.mxu0
        %v805 = vpop.f32.mrf.mxu0
        %v806 = vadd.f32 %v694, %v805
        %v807 = vpop.f32.mrf.mxu0
        %808 = vmatprep.mubr.bf16.mxu0 0
        %809 = vmatmul.mubr.bf16.gmra.mxu0 %v667
        %v810 = vpop.f32.mrf.mxu0
        %v811 = vadd.f32 %v694, %v810
        %v812 = vpop.f32.mrf.mxu0
        %v813 = vpop.f32.mrf.mxu0
        %v814 = vadd.f32 %v694, %v813
        %v815 = vpop.f32.mrf.mxu0
        %816 = vmatprep.mubr.bf16.mxu0 0
        %817 = vmatmul.mubr.bf16.gmra.mxu0 %v668
        %v818 = vpop.f32.mrf.mxu0
        %v819 = vadd.f32 %v694, %v818
        %v820 = vpop.f32.mrf.mxu0
        %v821 = vpop.f32.mrf.mxu0
        %v822 = vadd.f32 %v694, %v821
        %v823 = vpop.f32.mrf.mxu0
        %824 = vmatprep.mubr.bf16.mxu0 0
        %825 = vmatmul.mubr.bf16.gmra.mxu0 %v669
        %v826 = vpop.f32.mrf.mxu0
        %v827 = vadd.f32 %v694, %v826
        %v828 = vpop.f32.mrf.mxu0
        %v829 = vpop.f32.mrf.mxu0
        %v830 = vadd.f32 %v694, %v829
        %v831 = vpop.f32.mrf.mxu0
        %832 = vmatprep.mubr.bf16.mxu0 0
        %833 = vmatmul.mubr.bf16.gmra.mxu0 %v670
        %v834 = vpop.f32.mrf.mxu0
        %v835 = vadd.f32 %v694, %v834
        %v836 = vpop.f32.mrf.mxu0
        %v837 = vpop.f32.mrf.mxu0
        %v838 = vadd.f32 %v694, %v837
        %v839 = vpop.f32.mrf.mxu0
        %840 = vdwg.mxu0
        %v841 = vmax.f32 %v779, 0.0
        %v842 = vmax.f32 %v782, 0.0
        %v843 = vmax.f32 %v787, 0.0
        %v844 = vmax.f32 %v790, 0.0
        %v845 = vmax.f32 %v795, 0.0
        %v846 = vmax.f32 %v798, 0.0
        %v847 = vmax.f32 %v803, 0.0
        %v848 = vmax.f32 %v806, 0.0
        %v849 = vmax.f32 %v811, 0.0
        %v850 = vmax.f32 %v814, 0.0
        %v851 = vmax.f32 %v819, 0.0
        %v852 = vmax.f32 %v822, 0.0
        %v853 = vmax.f32 %v827, 0.0
        %v854 = vmax.f32 %v830, 0.0
        %v855 = vmax.f32 %v835, 0.0
        %v856 = vmax.f32 %v838, 0.0
        %v857 = vpack.c.bf16 %v842, %v841
        %v858 = vpack.c.bf16 %v844, %v843
        %v859 = vpack.c.bf16 %v846, %v845
        %v860 = vpack.c.bf16 %v848, %v847
        %v861 = vpack.c.bf16 %v850, %v849
        %v862 = vpack.c.bf16 %v852, %v851
        %v863 = vpack.c.bf16 %v854, %v853
        %v864 = vpack.c.bf16 %v856, %v855
        %s865 = scalar_lea.vmem [#allocation5], 192
        %v866 = vld [vmem:[%s865] sm:$0xf]
        %v867 = vld [vmem:[%s865 + $0x4] sm:$0xf]
        %v868 = vld [vmem:[%s865 + $0x8] sm:$0xf]
        %v869 = vld [vmem:[%s865 + $0xc] sm:$0xf]
        %v870 = vld [vmem:[%s865 + $0x10] sm:$0xf]
        %v871 = vld [vmem:[%s865 + $0x14] sm:$0xf]
        %v872 = vld [vmem:[%s865 + $0x18] sm:$0xf]
        %v873 = vld [vmem:[%s865 + $0x1c] sm:$0xf]
        %v874 = vld [vmem:[%s865 + $0x20] sm:$0xf]
        %v875 = vld [vmem:[%s865 + $0x24] sm:$0xf]
        %v876 = vld [vmem:[%s865 + $0x28] sm:$0xf]
        %v877 = vld [vmem:[%s865 + $0x2c] sm:$0xf]
        %v878 = vld [vmem:[%s865 + $0x30] sm:$0xf]
        %v879 = vld [vmem:[%s865 + $0x34] sm:$0xf]
        %v880 = vld [vmem:[%s865 + $0x38] sm:$0xf]
        %v881 = vld [vmem:[%s865 + $0x3c] sm:$0xf]
        %s882 = scalar_lea.vmem [#allocation7], 3
        %v883 = vld [vmem:[%s882] sm:$0x1]
        %v885 = vlaneseq
        %v886 = vshrl.u32 %v885, 7
        %v887 = vsub.s32 0, %v886
        %v888 = vrot.slane %v883, %v887
        %v906 = vunpack.c.l.b16 %v866
        %v907 = vunpack.c.l.b16 %v867
        %v908 = vunpack.c.l.b16 %v868
        %v909 = vunpack.c.l.b16 %v869
        %v910 = vunpack.c.l.b16 %v870
        %v911 = vunpack.c.l.b16 %v871
        %v912 = vunpack.c.l.b16 %v872
        %v913 = vunpack.c.l.b16 %v873
        %v914 = vunpack.c.l.b16 %v874
        %v915 = vunpack.c.l.b16 %v875
        %v916 = vunpack.c.l.b16 %v876
        %v917 = vunpack.c.l.b16 %v877
        %v918 = vunpack.c.l.b16 %v878
        %v919 = vunpack.c.l.b16 %v879
        %v920 = vunpack.c.l.b16 %v880
        %v921 = vunpack.c.l.b16 %v881
        %v922 = vpack.c.b16 %v907, %v906
        %v923 = vpack.c.b16 %v909, %v908
        %v924 = vpack.c.b16 %v911, %v910
        %v925 = vpack.c.b16 %v913, %v912
        %v926 = vpack.c.b16 %v915, %v914
        %v927 = vpack.c.b16 %v917, %v916
        %v928 = vpack.c.b16 %v919, %v918
        %v929 = vpack.c.b16 %v921, %v920
        %938 = vmatprep.subr.bf16.mxu0 0
        %939 = vmatpush1.bf16.msra.mxu0 %v929
        %940 = vmatprep.subr.bf16.mxu0 0
        %941 = vmatpush1.bf16.msra.mxu0 %v928
        %942 = vmatprep.subr.bf16.mxu0 0
        %943 = vmatpush1.bf16.msra.mxu0 %v927
        %944 = vmatprep.subr.bf16.mxu0 0
        %945 = vmatpush1.bf16.msra.mxu0 %v926
        %946 = vmatprep.subr.bf16.mxu0 0
        %947 = vmatpush1.bf16.msra.mxu0 %v925
        %948 = vmatprep.subr.bf16.mxu0 0
        %949 = vmatpush1.bf16.msra.mxu0 %v924
        %950 = vmatprep.subr.bf16.mxu0 0
        %951 = vmatpush1.bf16.msra.mxu0 %v923
        %952 = vmatprep.subr.bf16.mxu0 0
        %953 = vmatpush1.bf16.msra.mxu0 %v922
        %954 = vmatprep.subr.bf16.mxu0 0
        %955 = vmatpush2.bf16.msra.mxu0 0
        %956 = vmatprep.subr.bf16.mxu0 0
        %957 = vmatpush2.bf16.msra.mxu0 0
        %958 = vmatprep.subr.bf16.mxu0 0
        %959 = vmatpush2.bf16.msra.mxu0 0
        %960 = vmatprep.subr.bf16.mxu0 0
        %961 = vmatpush2.bf16.msra.mxu0 0
        %962 = vmatprep.subr.bf16.mxu0 0
        %963 = vmatpush2.bf16.msra.mxu0 0
        %964 = vmatprep.subr.bf16.mxu0 0
        %965 = vmatpush2.bf16.msra.mxu0 0
        %966 = vmatprep.subr.bf16.mxu0 0
        %967 = vmatpush2.bf16.msra.mxu0 0
        %968 = vmatprep.subr.bf16.mxu0 0
        %969 = vmatpush2.bf16.msra.mxu0 0
        %970 = vmatprep.mubr.bf16.mxu0 0
        %971 = vmatmul.mubr.bf16.gmra.mxu0 %v857
        %v972 = vpop.f32.mrf.mxu0
        %v973 = vadd.f32 %v888, %v972
        %v974 = vpop.f32.mrf.mxu0
        %v975 = vpop.f32.mrf.mxu0
        %v976 = vadd.f32 %v888, %v975
        %v977 = vpop.f32.mrf.mxu0
        %978 = vmatprep.mubr.bf16.mxu0 0
        %979 = vmatmul.mubr.bf16.gmra.mxu0 %v858
        %v980 = vpop.f32.mrf.mxu0
        %v981 = vadd.f32 %v888, %v980
        %v982 = vpop.f32.mrf.mxu0
        %v983 = vpop.f32.mrf.mxu0
        %v984 = vadd.f32 %v888, %v983
        %v985 = vpop.f32.mrf.mxu0
        %986 = vmatprep.mubr.bf16.mxu0 0
        %987 = vmatmul.mubr.bf16.gmra.mxu0 %v859
        %v988 = vpop.f32.mrf.mxu0
        %v989 = vadd.f32 %v888, %v988
        %v990 = vpop.f32.mrf.mxu0
        %v991 = vpop.f32.mrf.mxu0
        %v992 = vadd.f32 %v888, %v991
        %v993 = vpop.f32.mrf.mxu0
        %994 = vmatprep.mubr.bf16.mxu0 0
        %995 = vmatmul.mubr.bf16.gmra.mxu0 %v860
        %v996 = vpop.f32.mrf.mxu0
        %v997 = vadd.f32 %v888, %v996
        %v998 = vpop.f32.mrf.mxu0
        %v999 = vpop.f32.mrf.mxu0
        %v1000 = vadd.f32 %v888, %v999
        %v1001 = vpop.f32.mrf.mxu0
        %1002 = vmatprep.mubr.bf16.mxu0 0
        %1003 = vmatmul.mubr.bf16.gmra.mxu0 %v861
        %v1004 = vpop.f32.mrf.mxu0
        %v1005 = vadd.f32 %v888, %v1004
        %v1006 = vpop.f32.mrf.mxu0
        %v1007 = vpop.f32.mrf.mxu0
        %v1008 = vadd.f32 %v888, %v1007
        %v1009 = vpop.f32.mrf.mxu0
        %1010 = vmatprep.mubr.bf16.mxu0 0
        %1011 = vmatmul.mubr.bf16.gmra.mxu0 %v862
        %v1012 = vpop.f32.mrf.mxu0
        %v1013 = vadd.f32 %v888, %v1012
        %v1014 = vpop.f32.mrf.mxu0
        %v1015 = vpop.f32.mrf.mxu0
        %v1016 = vadd.f32 %v888, %v1015
        %v1017 = vpop.f32.mrf.mxu0
        %1018 = vmatprep.mubr.bf16.mxu0 0
        %1019 = vmatmul.mubr.bf16.gmra.mxu0 %v863
        %v1020 = vpop.f32.mrf.mxu0
        %v1021 = vadd.f32 %v888, %v1020
        %v1022 = vpop.f32.mrf.mxu0
        %v1023 = vpop.f32.mrf.mxu0
        %v1024 = vadd.f32 %v888, %v1023
        %v1025 = vpop.f32.mrf.mxu0
        %1026 = vmatprep.mubr.bf16.mxu0 0
        %1027 = vmatmul.mubr.bf16.gmra.mxu0 %v864
        %v1028 = vpop.f32.mrf.mxu0
        %v1029 = vadd.f32 %v888, %v1028
        %v1030 = vpop.f32.mrf.mxu0
        %v1031 = vpop.f32.mrf.mxu0
        %v1032 = vadd.f32 %v888, %v1031
        %v1033 = vpop.f32.mrf.mxu0
        %1034 = vdwg.mxu0
        %1035 = vst [vmem:[%s217] sm:$0xff] %v973
        %1036 = vst [vmem:[%s217 + $0x8] sm:$0xff] %v976
        %1037 = vst [vmem:[%s217 + $0x10] sm:$0xff] %v981
        %1038 = vst [vmem:[%s217 + $0x18] sm:$0xff] %v984
        %1039 = vst [vmem:[%s217 + $0x20] sm:$0xff] %v989
        %1040 = vst [vmem:[%s217 + $0x28] sm:$0xff] %v992
        %1041 = vst [vmem:[%s217 + $0x30] sm:$0xff] %v997
        %1042 = vst [vmem:[%s217 + $0x38] sm:$0xff] %v1000
        %1043 = vst [vmem:[%s217 + $0x40] sm:$0xff] %v1005
        %1044 = vst [vmem:[%s217 + $0x48] sm:$0xff] %v1008
        %1045 = vst [vmem:[%s217 + $0x50] sm:$0xff] %v1013
        %1046 = vst [vmem:[%s217 + $0x58] sm:$0xff] %v1016
        %1047 = vst [vmem:[%s217 + $0x60] sm:$0xff] %v1021
        %1048 = vst [vmem:[%s217 + $0x68] sm:$0xff] %v1024
        %1049 = vst [vmem:[%s217 + $0x70] sm:$0xff] %v1029
        %1050 = vst [vmem:[%s217 + $0x78] sm:$0xff] %v1032
        %s1051 = sand.u32 %s97, 1
        %s1052 = scalar_lea.sflag [#allocation4], %s1051
        %s1053 = sand.u32 %s97, 1
        %s1054 = smul.addr %s1053, 128
        %s1055 = scalar_lea.vmem [#allocation8], %s1054
        // Predicated region
        $region45: #{tpu_custom_call.1} parent=31 // pred_check
          %p1056 = pneg %p107
        $region46: #{tpu_custom_call.1} parent=31 // pred_check_branch
          %1058 = sbr.rel (%p1056) target = $region48
        $region47: #{tpu_custom_call.1} parent=31 // pred_region
          %s1059 = smul.u32 16, %s21
          %s1061 = ssub.s32 2048, 2048
          %1062 = vsyncadd %s1052, %s1061
          %s1063 = smul.addr %s1059, 128
          %s1064 = scalar_lea.hbm %s3, %s1063
          %s1065 = sshll.u32 %s1055, 4
          %s1066 = int_to_ptr.vmem [resolvable:$true] %s1065
          %1071 = dma.vmem_to_hbm [thread:$0]  %s1066, 2048, %s1064, %s1052, 128, 128, 8
        $region48: #{tpu_custom_call.1} parent=31 // pred_fallthru
          _
      $region32: #{tpu_custom_call.1} parent=5 // pred_fallthru
        _
      %p1072 = scmp.le.s32.totalorder 2, %s16
      // Predicated region
      $region49: #{tpu_custom_call.1} parent=5 // pred_check
        %p1073 = pneg %p1072
      $region50: #{tpu_custom_call.1} parent=5 // pred_check_branch
        %1075 = sbr.rel (%p1073) target = $region52
      $region51: #{tpu_custom_call.1} parent=5 // pred_region
        %s1076 = ssub.s32 %s16, 2
        // Predicated region
        $region53: #{tpu_custom_call.1} parent=51 // pred_check
          %p1077 = pneg %p113
        $region54: #{tpu_custom_call.1} parent=51 // pred_check_branch
          %1079 = sbr.rel (%p1077) target = $region56
        $region55: #{tpu_custom_call.1} parent=51 // pred_region
          %s1080 = sand.u32 %s98, 1
          %s1081 = scalar_lea.sflag [#allocation4], %s1080
          %s1082 = sand.u32 %s98, 1
          %s1083 = smul.addr %s1082, 128
          %s1084 = scalar_lea.vmem [#allocation8], %s1083
          %1085 = dma.done %s1081, 2048
        $region56: #{tpu_custom_call.1} parent=51 // pred_fallthru
          _
      $region52: #{tpu_custom_call.1} parent=5 // pred_fallthru
        _
    $region6: #{tpu_custom_call.1} parent=1 // loop_footer
      %s20 = sadd.s32 1, %s16
    $region7: #{tpu_custom_call.1} parent=1 // loop_footer_branch
      %15 = sbr.rel target = $region3
    $region8: #{tpu_custom_call.1} parent=1 // loop_exit
      _
    %1086 = vsyncpa [#allocation3], 1
    %s1087 = scalar_lea.sflag [#allocation3], 1
    %1088 = vsyncpa %s1087, 1
    %1089 = vsyncpa [#allocation6], 1
    %1090 = vsyncpa [#allocation4], 1
    %s1091 = scalar_lea.sflag [#allocation4], 1
    %1092 = vsyncpa %s1091, 1

</llo_original>
